<compile_context>
chip_gen: v7x
topology: tpu7x:2x2x1
jax: 0.10.0
libtpu: 0.0.40
codegen_flags: <defaults>
</compile_context>

<pallas_src>
import math
import functools

import jax
import jax.numpy as jnp
from jax.experimental import pallas as pl
from jax.experimental.pallas import tpu as pltpu


def _gelu_tanh(x):
    # TODO(synk): PyTorch nn.GELU() defaults to the exact erf formulation; erf
    # has no guaranteed Mosaic lowering, so the standard tanh approximation
    # (max abs deviation ~3e-3) is used in both the kernel and the references.
    c = math.sqrt(2.0 / math.pi)
    return 0.5 * x * (1.0 + jnp.tanh(c * (x + 0.044715 * x * x * x)))


def _round_up(x, m):
    return (x + m - 1) // m * m


def _sin_tables(dim):
    """Trace-time frequency / phase tables for the fused sinusoidal embedding."""
    half = dim // 2
    scale = math.log(10000.0) / (half - 1)
    freqs = jnp.exp(jnp.arange(half, dtype=jnp.float32) * -scale)
    freqs2 = jnp.concatenate([freqs, freqs]).reshape(1, dim)
    phase = jnp.concatenate(
        [jnp.zeros((half,), jnp.float32),
         jnp.full((half,), math.pi / 2, jnp.float32)]).reshape(1, dim)
    return freqs2, phase


def _time_mlp_kernel(t_ref, freqs_ref, phase_ref, w1_ref, b1_ref, w2_ref, b2_ref,
                     out_ref):
    # t_ref: (Bb, 1) f32; freqs/phase: (1, dim) f32; w1: (dim, TD); w2: (TD, TD);
    # b1/b2: (1, TD) f32; out: (Bb, TD) f32.
    # sin(x + pi/2) == cos(x), so one transcendental sweep covers both halves.
    emb = jnp.sin(t_ref[...] * freqs_ref[...] + phase_ref[...])     # (Bb, dim) f32
    h = jnp.dot(emb.astype(w1_ref.dtype), w1_ref[...],
                preferred_element_type=jnp.float32) + b1_ref[...]   # single K=dim matmul
    h = _gelu_tanh(h)                                               # f32 VPU math (ok on v5e)
    out_ref[...] = (jnp.dot(h.astype(w2_ref.dtype), w2_ref[...],
                            preferred_element_type=jnp.float32) + b2_ref[...])


@functools.partial(jax.jit, static_argnames=("dim", "weight_dtype"))
def time_mlp_pallas(time, w1, b1, w2, b2, *, dim, weight_dtype=jnp.bfloat16):
    """Pallas equivalent of UnetEnergy.time_mlp(time).

    w1: (dim, time_dim)  -- transposed PyTorch Linear(dim, time_dim) weight
    b1: (time_dim,)
    w2: (time_dim, time_dim)
    b2: (time_dim,)
    """
    assert dim % 2 == 0 and dim >= 4, "dim must be even and >= 4"
    time_dim = w1.shape[1]
    assert w1.shape == (dim, time_dim)
    assert w2.shape == (time_dim, time_dim)
    assert time_dim % 128 == 0, "keep the output lane-dense (time_dim = 4*dim)"

    freqs2, phase = _sin_tables(dim)

    w1c = w1.astype(weight_dtype)
    w2c = w2.astype(weight_dtype)
    b1r = b1.reshape(1, time_dim).astype(jnp.float32)
    b2r = b2.reshape(1, time_dim).astype(jnp.float32)

    B = time.shape[0]
    if B >= 64:
        # >= 2 grid steps so the "parallel" batch axis shards across both
        # TensorCores on v7x; tiles stay large (cap 512) to amortize the
        # ~0.35 us per-step pipeline overhead.  VMEM footprint at 512 rows is
        # ~1 MB -- far under every generation's limit, so no vmem_limit needed.
        block_b = min(512, _round_up(pl.cdiv(B, 2), 8))
    else:
        # Tiny B (typical diffusion sampling): one step; splitting only adds
        # per-step overhead on 1-TC chips.
        block_b = _round_up(max(B, 1), 8)
    b_pad = _round_up(B, block_b)

    # Padded rows (t=0) produce valid-but-meaningless outputs; sliced off below.
    t2d = jnp.zeros((b_pad, 1), jnp.float32).at[:B, 0].set(time.astype(jnp.float32))

    grid = (b_pad // block_b,)

    w_itemsize = jnp.dtype(weight_dtype).itemsize
    cost = pl.CostEstimate(
        flops=2 * b_pad * dim * time_dim + 2 * b_pad * time_dim * time_dim,
        transcendentals=b_pad * (dim + time_dim),     # sin + tanh(GELU)
        bytes_accessed=int((dim * time_dim + time_dim * time_dim) * w_itemsize
                           + 2 * time_dim * 4 + 2 * dim * 4
                           + b_pad * 4 + b_pad * time_dim * 4),
    )

    out = pl.pallas_call(
        _time_mlp_kernel,
        out_shape=jax.ShapeDtypeStruct((b_pad, time_dim), jnp.float32),
        grid_spec=pltpu.PrefetchScalarGridSpec(
            num_scalar_prefetch=0,
            grid=grid,
            in_specs=[
                pl.BlockSpec((block_b, 1), lambda i: (i, 0)),          # timesteps
                pl.BlockSpec((1, dim), lambda i: (0, 0)),              # freqs2
                pl.BlockSpec((1, dim), lambda i: (0, 0)),              # phase
                pl.BlockSpec((dim, time_dim), lambda i: (0, 0)),       # W1 (resident)
                pl.BlockSpec((1, time_dim), lambda i: (0, 0)),         # b1
                pl.BlockSpec((time_dim, time_dim), lambda i: (0, 0)),  # W2 (resident)
                pl.BlockSpec((1, time_dim), lambda i: (0, 0)),         # b2
            ],
            out_specs=pl.BlockSpec((block_b, time_dim), lambda i: (i, 0)),
        ),
        compiler_params=pltpu.CompilerParams(
            dimension_semantics=("parallel",)),
        cost_estimate=cost,
    )(t2d, freqs2, phase, w1c, b1r, w2c, b2r)
    return out[:B]


def _reference_f32(time, w1, b1, w2, b2, *, dim):
    """Pure-JAX f32 reference matching UnetEnergy.time_mlp forward semantics."""
    half = dim // 2
    scale = math.log(10000.0) / (half - 1)
    freqs = jnp.exp(jnp.arange(half, dtype=jnp.float32) * -scale)
    args = time.astype(jnp.float32)[:, None] * freqs[None, :]
    emb = jnp.concatenate([jnp.sin(args), jnp.cos(args)], axis=-1)
    h = _gelu_tanh(emb @ w1 + b1[None, :])
    return h @ w2 + b2[None, :]


def _reference_matched(time, w1, b1, w2, b2, *, dim, weight_dtype=jnp.bfloat16):
    """Reference that mirrors the kernel's numeric path exactly:
    phase-shifted sin, bf16 matmul inputs, f32 accumulation, f32 GELU."""
    freqs2, phase = _sin_tables(dim)
    emb = jnp.sin(time.astype(jnp.float32)[:, None] * freqs2 + phase)
    h = jnp.dot(emb.astype(weight_dtype), w1.astype(weight_dtype),
                preferred_element_type=jnp.float32) + b1[None, :]
    h = _gelu_tanh(h)
    return jnp.dot(h.astype(weight_dtype), w2.astype(weight_dtype),
                   preferred_element_type=jnp.float32) + b2[None, :]


# TODO(synk): the rest of UnetEnergy (init_conv, ConvNext blocks, linear/softmax
# attention, down/upsampling convs, final_conv, e_out head) is a full U-Net and
# is left to XLA; only the time_mlp stage is implemented as a Pallas kernel.

if __name__ == "__main__":
    key = jax.random.PRNGKey(0)
    B, DIM = 8, 64
    TIME_DIM = 4 * DIM                                   # UnetEnergy: time_dim = dim * 4
    k_t, k_w1, k_b1, k_w2, k_b2 = jax.random.split(key, 5)

    # Integer diffusion timesteps per batch element.
    time = jax.random.randint(k_t, (B,), 0, 1000).astype(jnp.float32)
    w1 = jax.random.normal(k_w1, (DIM, TIME_DIM), jnp.float32) / math.sqrt(DIM)
    b1 = jax.random.normal(k_b1, (TIME_DIM,), jnp.float32) * 0.02
    w2 = jax.random.normal(k_w2, (TIME_DIM, TIME_DIM), jnp.float32) / math.sqrt(TIME_DIM)
    b2 = jax.random.normal(k_b2, (TIME_DIM,), jnp.float32) * 0.02

    # bf16-weight kernel (production config) + f32-weight kernel (precision baseline).
    out_bf16 = jax.block_until_ready(
        time_mlp_pallas(time, w1, b1, w2, b2, dim=DIM, weight_dtype=jnp.bfloat16))
    out_f32 = jax.block_until_ready(
        time_mlp_pallas(time, w1, b1, w2, b2, dim=DIM, weight_dtype=jnp.float32))

    ref_f32 = _reference_f32(time, w1, b1, w2, b2, dim=DIM)
    ref_matched = _reference_matched(time, w1, b1, w2, b2, dim=DIM,
                                     weight_dtype=jnp.bfloat16)

    assert out_bf16.shape == (B, TIME_DIM), out_bf16.shape
    assert out_f32.shape == (B, TIME_DIM), out_f32.shape

    # Tight check: kernel vs precision-matched reference (only Mosaic-vs-XLA
    # transcendental and accumulation-order differences remain).
    err_tight = float(jnp.max(jnp.abs(out_bf16 - ref_matched)))
    assert err_tight < 5e-3, f"bf16 kernel vs matched ref, max abs err={err_tight}"

    # Loose check: bf16 kernel vs full-f32 reference (bounds bf16 quantization drift).
    err_loose = float(jnp.max(jnp.abs(out_bf16 - ref_f32)))
    assert err_loose < 5e-2, f"bf16 kernel vs f32 ref, max abs err={err_loose}"

    # f32-weight kernel vs f32 reference (covers MXU precision-pass differences).
    err_f32 = float(jnp.max(jnp.abs(out_f32 - ref_f32)))
    assert err_f32 < 2e-2, f"f32 kernel vs f32 ref, max abs err={err_f32}"

    print("KERNEL_OK")
</pallas_src>

<mosaic_0001>
module attributes {stable_mosaic.version = 11 : i64} {
  func.func @_time_mlp_kernel(%arg0: i32, %arg1: memref<8x1xf32, #tpu.memory_space<vmem>>, %arg2: memref<1x64xf32, #tpu.memory_space<vmem>>, %arg3: memref<1x64xf32, #tpu.memory_space<vmem>>, %arg4: memref<64x256xbf16, #tpu.memory_space<vmem>>, %arg5: memref<1x256xf32, #tpu.memory_space<vmem>>, %arg6: memref<256x256xbf16, #tpu.memory_space<vmem>>, %arg7: memref<1x256xf32, #tpu.memory_space<vmem>>, %arg8: memref<8x256xf32, #tpu.memory_space<vmem>>) attributes {dimension_semantics = [#tpu.dimension_semantics<parallel>], iteration_bounds = array<i64: 1>, scalar_prefetch = 0 : i64, scratch_operands = 0 : i64, tpu.core_type = #tpu.core_type<tc>, window_params = [{transform_indices = @transform_0, window_bounds = array<i64: 8, 1>}, {pipeline_mode = #tpu.pipeline_mode<synchronous>, transform_indices = @transform_1, window_bounds = array<i64: 1, 64>}, {pipeline_mode = #tpu.pipeline_mode<synchronous>, transform_indices = @transform_2, window_bounds = array<i64: 1, 64>}, {pipeline_mode = #tpu.pipeline_mode<synchronous>, transform_indices = @transform_3, window_bounds = array<i64: 64, 256>}, {pipeline_mode = #tpu.pipeline_mode<synchronous>, transform_indices = @transform_4, window_bounds = array<i64: 1, 256>}, {pipeline_mode = #tpu.pipeline_mode<synchronous>, transform_indices = @transform_5, window_bounds = array<i64: 256, 256>}, {pipeline_mode = #tpu.pipeline_mode<synchronous>, transform_indices = @transform_6, window_bounds = array<i64: 1, 256>}, {transform_indices = @transform_7, window_bounds = array<i64: 8, 256>}]} {
    %c0 = arith.constant 0 : index
    %c0_0 = arith.constant 0 : index
    %0 = vector.load %arg1[%c0, %c0_0] : memref<8x1xf32, #tpu.memory_space<vmem>>, vector<8x1xf32>
    %c0_1 = arith.constant 0 : index
    %c0_2 = arith.constant 0 : index
    %1 = vector.load %arg2[%c0_1, %c0_2] : memref<1x64xf32, #tpu.memory_space<vmem>>, vector<1x64xf32>
    %2 = vector.broadcast %0 : vector<8x1xf32> to vector<8x64xf32>
    %3 = vector.broadcast %1 : vector<1x64xf32> to vector<8x64xf32>
    %4 = arith.mulf %2, %3 : vector<8x64xf32>
    %c0_3 = arith.constant 0 : index
    %c0_4 = arith.constant 0 : index
    %5 = vector.load %arg3[%c0_3, %c0_4] : memref<1x64xf32, #tpu.memory_space<vmem>>, vector<1x64xf32>
    %6 = vector.broadcast %5 : vector<1x64xf32> to vector<8x64xf32>
    %7 = arith.addf %4, %6 : vector<8x64xf32>
    %8 = math.sin %7 : vector<8x64xf32>
    %9 = arith.truncf %8 : vector<8x64xf32> to vector<8x64xbf16>
    %c0_5 = arith.constant 0 : index
    %c0_6 = arith.constant 0 : index
    %10 = vector.load %arg4[%c0_5, %c0_6] : memref<64x256xbf16, #tpu.memory_space<vmem>>, vector<64x256xbf16>
    %cst = arith.constant dense<0.000000e+00> : vector<8x256xf32>
    %11 = tpu.matmul %9, %10, %cst {dimension_numbers = #tpu.dot_dimension_numbers<[1], [0], [0], [1], [0, 0, 1, 1], [], []>} : vector<8x64xbf16>, vector<64x256xbf16>, vector<8x256xf32> -> vector<8x256xf32>
    %c0_7 = arith.constant 0 : index
    %c0_8 = arith.constant 0 : index
    %12 = vector.load %arg5[%c0_7, %c0_8] : memref<1x256xf32, #tpu.memory_space<vmem>>, vector<1x256xf32>
    %13 = vector.broadcast %12 : vector<1x256xf32> to vector<8x256xf32>
    %14 = arith.addf %11, %13 : vector<8x256xf32>
    %cst_9 = arith.constant 5.000000e-01 : f32
    %15 = vector.broadcast %cst_9 : f32 to vector<8x256xf32>
    %16 = arith.mulf %15, %14 : vector<8x256xf32>
    %cst_10 = arith.constant 4.471500e-02 : f32
    %17 = vector.broadcast %cst_10 : f32 to vector<8x256xf32>
    %18 = arith.mulf %17, %14 : vector<8x256xf32>
    %19 = arith.mulf %18, %14 : vector<8x256xf32>
    %20 = arith.mulf %19, %14 : vector<8x256xf32>
    %21 = arith.addf %14, %20 : vector<8x256xf32>
    %cst_11 = arith.constant 0.797884583 : f32
    %22 = vector.broadcast %cst_11 : f32 to vector<8x256xf32>
    %23 = arith.mulf %22, %21 : vector<8x256xf32>
    %24 = math.tanh %23 : vector<8x256xf32>
    %cst_12 = arith.constant 1.000000e+00 : f32
    %25 = vector.broadcast %cst_12 : f32 to vector<8x256xf32>
    %26 = arith.addf %25, %24 : vector<8x256xf32>
    %27 = arith.mulf %16, %26 : vector<8x256xf32>
    %28 = arith.truncf %27 : vector<8x256xf32> to vector<8x256xbf16>
    %c0_13 = arith.constant 0 : index
    %c0_14 = arith.constant 0 : index
    %29 = vector.load %arg6[%c0_13, %c0_14] : memref<256x256xbf16, #tpu.memory_space<vmem>>, vector<256x256xbf16>
    %cst_15 = arith.constant dense<0.000000e+00> : vector<8x256xf32>
    %30 = tpu.matmul %28, %29, %cst_15 {dimension_numbers = #tpu.dot_dimension_numbers<[1], [0], [0], [1], [0, 0, 1, 1], [], []>} : vector<8x256xbf16>, vector<256x256xbf16>, vector<8x256xf32> -> vector<8x256xf32>
    %c0_16 = arith.constant 0 : index
    %c0_17 = arith.constant 0 : index
    %31 = vector.load %arg7[%c0_16, %c0_17] : memref<1x256xf32, #tpu.memory_space<vmem>>, vector<1x256xf32>
    %32 = vector.broadcast %31 : vector<1x256xf32> to vector<8x256xf32>
    %33 = arith.addf %30, %32 : vector<8x256xf32>
    %c0_18 = arith.constant 0 : index
    %c0_19 = arith.constant 0 : index
    %34 = vector.load %arg8[%c0_18, %c0_19] : memref<8x256xf32, #tpu.memory_space<vmem>>, vector<8x256xf32>
    tpu.vector_store %arg8[%c0_18, %c0_19], %33 {strides = array<i32>} : memref<8x256xf32, #tpu.memory_space<vmem>>, vector<8x256xf32>,
    return
  }
  func.func @transform_0(%arg0: i32) -> (i32, i32) {
    %c0_i32 = arith.constant 0 : i32
    %c0_i32_0 = arith.constant 0 : i32
    return %arg0, %c0_i32 : i32, i32
  }
  func.func @transform_1(%arg0: i32) -> (i32, i32) {
    %c0_i32 = arith.constant 0 : i32
    %c0_i32_0 = arith.constant 0 : i32
    %c0_i32_1 = arith.constant 0 : i32
    return %c0_i32, %c0_i32_0 : i32, i32
  }
  func.func @transform_2(%arg0: i32) -> (i32, i32) {
    %c0_i32 = arith.constant 0 : i32
    %c0_i32_0 = arith.constant 0 : i32
    %c0_i32_1 = arith.constant 0 : i32
    return %c0_i32, %c0_i32_0 : i32, i32
  }
  func.func @transform_3(%arg0: i32) -> (i32, i32) {
    %c0_i32 = arith.constant 0 : i32
    %c0_i32_0 = arith.constant 0 : i32
    %c0_i32_1 = arith.constant 0 : i32
    return %c0_i32, %c0_i32_0 : i32, i32
  }
  func.func @transform_4(%arg0: i32) -> (i32, i32) {
    %c0_i32 = arith.constant 0 : i32
    %c0_i32_0 = arith.constant 0 : i32
    %c0_i32_1 = arith.constant 0 : i32
    return %c0_i32, %c0_i32_0 : i32, i32
  }
  func.func @transform_5(%arg0: i32) -> (i32, i32) {
    %c0_i32 = arith.constant 0 : i32
    %c0_i32_0 = arith.constant 0 : i32
    %c0_i32_1 = arith.constant 0 : i32
    return %c0_i32, %c0_i32_0 : i32, i32
  }
  func.func @transform_6(%arg0: i32) -> (i32, i32) {
    %c0_i32 = arith.constant 0 : i32
    %c0_i32_0 = arith.constant 0 : i32
    %c0_i32_1 = arith.constant 0 : i32
    return %c0_i32, %c0_i32_0 : i32, i32
  }
  func.func @transform_7(%arg0: i32) -> (i32, i32) {
    %c0_i32 = arith.constant 0 : i32
    %c0_i32_0 = arith.constant 0 : i32
    return %arg0, %c0_i32 : i32, i32
  }
}

</mosaic_0001>

<llo_original>
// kernel: time_mlp_pallas.1
$region0: #{time_mlp_pallas.1}
  #allocation0 [shape = 'u32[]', space=smem, size = 0x4, offset = 0x4, fixed_abs, tag = 'smem constant byte address 0x4 - core index']
  #allocation1 [shape = 'u32[144,128]{1,0:T(1,128)}', space=vmem, size = 0x12000, scoped, tag = 'internal scratch']
  %s0 = inlined_call_operand.vmem [shape: f32[8,1], index: 0, kind: input, shape index: {}]
  %s1 = inlined_call_operand.vmem [shape: f32[1,64], index: 1, kind: input, shape index: {}]
  %s2 = inlined_call_operand.vmem [shape: f32[1,64], index: 2, kind: input, shape index: {}]
  %s3 = inlined_call_operand.vmem [shape: bf16[64,256], index: 3, kind: input, shape index: {}]
  %s4 = inlined_call_operand.vmem [shape: f32[1,256], index: 4, kind: input, shape index: {}]
  %s5 = inlined_call_operand.vmem [shape: bf16[256,256], index: 5, kind: input, shape index: {}]
  %s6 = inlined_call_operand.vmem [shape: f32[1,256], index: 6, kind: input, shape index: {}]
  %s7 = inlined_call_operand.hbm [shape: f32[8,256], index: 7, kind: output, shape index: {}]
  %s8 = sld [smem:[#allocation0]]
  $region38: #{time_mlp_pallas.1} parent=0
    _
  %s10 = ssub.s32 1, %s8
  %s11 = scalar_select 0, %s10, %s8
  $region1: #{time_mlp_pallas.1} parent=0
    #allocation2 [shape = 'u8[8192]{0}', space=vmem, size = 0x2000, scoped, tag = 'output window, operand 0, single buffered']
    #allocation3 [shape = 's32[1]{0}', space=sflag, size = 0x4, scoped, tag = 'scoped memory for time_mlp_pallas.1']
    %12 = vsyncpa [#allocation3], 0
    // Predicated region
    $region2: #{time_mlp_pallas.1} parent=1 // pred_check
      _
    $region3: #{time_mlp_pallas.1} parent=1 // pred_check_branch
      %14 = sbr.rel (0) target = $region5
    $region4: #{time_mlp_pallas.1} parent=1 // pred_region
      _
    $region5: #{time_mlp_pallas.1} parent=1 // pred_fallthru
      _
    // Predicated region
    $region6: #{time_mlp_pallas.1} parent=1 // pred_check
      _
    $region7: #{time_mlp_pallas.1} parent=1 // pred_check_branch
      %16 = sbr.rel (0) target = $region9
    $region8: #{time_mlp_pallas.1} parent=1 // pred_region
      _
    $region9: #{time_mlp_pallas.1} parent=1 // pred_fallthru
      _
    // Predicated region
    $region10: #{time_mlp_pallas.1} parent=1 // pred_check
      _
    $region11: #{time_mlp_pallas.1} parent=1 // pred_check_branch
      %18 = sbr.rel (0) target = $region13
    $region12: #{time_mlp_pallas.1} parent=1 // pred_region
      _
    $region13: #{time_mlp_pallas.1} parent=1 // pred_fallthru
      _
    // Predicated region
    $region14: #{time_mlp_pallas.1} parent=1 // pred_check
      _
    $region15: #{time_mlp_pallas.1} parent=1 // pred_check_branch
      %20 = sbr.rel (0) target = $region17
    $region16: #{time_mlp_pallas.1} parent=1 // pred_region
      _
    $region17: #{time_mlp_pallas.1} parent=1 // pred_fallthru
      _
    // Predicated region
    $region18: #{time_mlp_pallas.1} parent=1 // pred_check
      _
    $region19: #{time_mlp_pallas.1} parent=1 // pred_check_branch
      %22 = sbr.rel (0) target = $region21
    $region20: #{time_mlp_pallas.1} parent=1 // pred_region
      _
    $region21: #{time_mlp_pallas.1} parent=1 // pred_fallthru
      _
    // Predicated region
    $region22: #{time_mlp_pallas.1} parent=1 // pred_check
      _
    $region23: #{time_mlp_pallas.1} parent=1 // pred_check_branch
      %24 = sbr.rel (0) target = $region25
    $region24: #{time_mlp_pallas.1} parent=1 // pred_region
      _
    $region25: #{time_mlp_pallas.1} parent=1 // pred_fallthru
      _
    // Predicated region
    $region26: #{time_mlp_pallas.1} parent=1 // pred_check
      _
    $region27: #{time_mlp_pallas.1} parent=1 // pred_check_branch
      %26 = sbr.rel (0) target = $region29
    $region28: #{time_mlp_pallas.1} parent=1 // pred_region
      _
    $region29: #{time_mlp_pallas.1} parent=1 // pred_fallthru
      _
    %v28 = vld [vmem:[%s0] sm:$0xff]
    %v29 = vld [vmem:[%s1] sm:$0x1]
    %31 = vset.pattern.permute.xlu0 0
    %32 = vperm.xlu0 %31, %v28
    %v33 = vpop.permute.xlu0 %32
    %v36 = vlaneseq
    %v37 = vshrl.u32 %v36, 7
    %v38 = vsub.s32 0, %v37
    %v39 = vrot.slane %v29, %v38
    %v41 = vmul.f32 %v33, %v39
    %v42 = vld [vmem:[%s2] sm:$0x1]
    %v44 = vlaneseq
    %v45 = vshrl.u32 %v44, 7
    %v46 = vsub.s32 0, %v45
    %v47 = vrot.slane %v42, %v46
    %v49 = vadd.f32 %v41, %v47
    %v50 = vand.u32 2147483647, %v49
    %vm51 = vcmp.le.f32.partialorder %v50, 0.7853982
    %vm52 = vcmp.lt.s32.totalorder %v49, 0
    %v53 = vand.u32 %v49, 2139095040
    %v54 = vshrl.u32 %v53, 23
    %v55 = vsub.s32 %v54, 127
    %v56 = vand.u32 2147483647, %v49
    %v57 = vand.u32 %v56, 8388607
    %v58 = vor.u32 %v57, 8388608
    %v59 = vsub.s32 0, %v58
    %v60 = vadd.s32 %v55, 1
    %vm61 = vcmp.gt.s32.totalorder %v60, 0
    %v62 = vsel %vm61, %v60, 0
    %v63 = vshrl.u32 %v62, 5
    %v64 = vand.u32 %v62, 31
    %v65 = vsub.s32 32, %v64
    %v66 = vshrl.u32 683565275, %v65
    %v67 = vshll.u32 683565275, %v64
    %v68 = vshrl.u32 2475754826, %v65
    %v69 = vor.u32 %v67, %v68
    %v70 = vshll.u32 2475754826, %v64
    %v71 = vshrl.u32 2131351028, %v65
    %v72 = vor.u32 %v70, %v71
    %v73 = vshll.u32 2131351028, %v64
    %v74 = vshrl.u32 2102212464, %v65
    %v75 = vor.u32 %v73, %v74
    %v76 = vshll.u32 2102212464, %v64
    %v77 = vshrl.u32 920167782, %v65
    %v78 = vor.u32 %v76, %v77
    %v79 = vshll.u32 920167782, %v64
    %v80 = vshrl.u32 1326507024, %v65
    %v81 = vor.u32 %v79, %v80
    %vm82 = vcmp.lt.s32.totalorder %v63, 1
    %vm83 = vcmp.lt.s32.totalorder %v63, 2
    %vm84 = vcmp.lt.s32.totalorder %v63, 3
    %vm85 = vcmp.lt.s32.totalorder %v63, 4
    %v86 = vsel %vm82, %v66, %v69
    %v87 = vsel %vm85, %v75, 2102212464
    %v88 = vsel %vm84, %v72, %v87
    %v89 = vsel %vm83, %v86, %v88
    %v90 = vsel %vm82, %v69, %v72
    %v91 = vsel %vm85, %v78, 920167782
    %v92 = vsel %vm84, %v75, %v91
    %v93 = vsel %vm83, %v90, %v92
    %v94 = vsel %vm82, %v72, %v75
    %v95 = vsel %vm85, %v81, 1326507024
    %v96 = vsel %vm84, %v78, %v95
    %v97 = vsel %vm83, %v94, %v96
    %v98 = vshll.u32 %v58, 8
    %v99 = vmul.u32.u64.compose %v98, %v97
    %v100 = vextract.low.u32 %v99
    %v101 = vextract.high.u32 %v99
    %v102 = vmul.u32.u64.compose %v98, %v93
    %v103 = vextract.low.u32 %v102
    %v104 = vextract.high.u32 %v102
    %v105 = vmul.u32 %v98, %v89
    %v106 = vadd.s32 %v101, %v103
    %vm107 = vc.u32 %v101, %v103
    %v108 = vadd.s32 %v104, 1
    %v109 = vsel %vm107, %v108, %v104
    %v110 = vadd.s32 %v105, %v109
    %v111 = vadd.s32 %v110, 536870912
    %v112 = vshrl.u32 %v111, 30
    %v113 = vshll.u32 %v112, 30
    %v114 = vsub.s32 %v110, %v113
    %vm115 = vcmp.lt.s32.totalorder %v114, 0
    %v116 = vsub.s32 0, %v114
    %v117 = vsel %vm115, %v116, %v114
    %v118 = vclz %v117
    %v119 = vsub.s32 %v118, 2
    %vm120 = vcmp.gt.s32.totalorder 0, %v119
    %v121 = vsel %vm120, 0, %v119
    %v122 = vsub.s32 32, %v121
    %v123 = vshll.u32 %v114, %v121
    %v124 = vshrl.u32 %v106, %v122
    %v125 = vor.u32 %v123, %v124
    %v126 = vsub.s32 4294967266, %v121
    %v127 = vadd.s32 %v126, 127
    %v128 = vshll.u32 %v127, 23
    %v129 = vor.u32 4788187, %v128
    %v130 = vand.u32 2147483647, %v129
    %v132 = vcvt.s32.f32 %v125
    %v133 = vmul.f32 %v132, %v130
    %v134 = vxor.u32 %v133, 2147483648
    %v135 = vsel %vm52, %v134, %v133
    %v136 = vsub.s32 4, %v112
    %v137 = vsel %vm52, %v136, %v112
    %v138 = vsel %vm51, %v49, %v135
    %v139 = vsel %vm51, 0, %v137
    %v140 = vcosq.f32.pop %v138
    %v141 = vsinq.f32.pop %v138
    %vm142 = vweird.f32 %v49
    %v143 = vadd.s32 %v139, 3
    %v144 = vand.u32 %v143, 3
    %vm145 = vcmp.lt.s32.totalorder %v144, 2
    %vm146 = vcmp.eq.s32.totalorder %v144, 0
    %v147 = vxor.u32 %v141, 2147483648
    %v148 = vsel %vm146, %v140, %v147
    %vm149 = vcmp.eq.s32.totalorder %v144, 2
    %v150 = vxor.u32 %v140, 2147483648
    %v151 = vsel %vm149, %v150, %v141
    %v152 = vsel %vm145, %v148, %v151
    %v153 = vsel %vm142, nan, %v152
    %v154 = vpack.c.bf16 %v153, %v153
    %v155 = vld [vmem:[%s3] sm:$0xff]
    %v156 = vld [vmem:[%s3 + $0x8] sm:$0xff]
    %v157 = vld [vmem:[%s3 + $0x10] sm:$0xff]
    %v158 = vld [vmem:[%s3 + $0x18] sm:$0xff]
    %v159 = vld [vmem:[%s3 + $0x20] sm:$0xff]
    %v160 = vld [vmem:[%s3 + $0x28] sm:$0xff]
    %v161 = vld [vmem:[%s3 + $0x30] sm:$0xff]
    %v162 = vld [vmem:[%s3 + $0x38] sm:$0xff]
    %v163 = vld [vmem:[%s4] sm:$0x3]
    %v165 = vlaneseq
    %v166 = vshrl.u32 %v165, 7
    %v167 = vsub.s32 0, %v166
    %v168 = vrot.slane %v163, %v167
    %v169 = vlaneseq
    %v170 = vshrl.u32 %v169, 7
    %v171 = vsub.s32 1, %v170
    %v172 = vrot.slane %v163, %v171
    %v183 = vunpack.c.l.b16 %v155
    %v184 = vunpack.c.h.b16 %v155
    %v185 = vunpack.c.l.b16 %v156
    %v186 = vunpack.c.h.b16 %v156
    %v187 = vunpack.c.l.b16 %v157
    %v188 = vunpack.c.h.b16 %v157
    %v189 = vunpack.c.l.b16 %v158
    %v190 = vunpack.c.h.b16 %v158
    %v191 = vunpack.c.l.b16 %v159
    %v192 = vunpack.c.h.b16 %v159
    %v193 = vunpack.c.l.b16 %v160
    %v194 = vunpack.c.h.b16 %v160
    %v195 = vunpack.c.l.b16 %v161
    %v196 = vunpack.c.h.b16 %v161
    %v197 = vunpack.c.l.b16 %v162
    %v198 = vunpack.c.h.b16 %v162
    %v199 = vpack.c.b16 %v185, %v183
    %v200 = vpack.c.b16 %v186, %v184
    %v201 = vpack.c.b16 %v189, %v187
    %v202 = vpack.c.b16 %v190, %v188
    %v203 = vpack.c.b16 %v193, %v191
    %v204 = vpack.c.b16 %v194, %v192
    %v205 = vpack.c.b16 %v197, %v195
    %v206 = vpack.c.b16 %v198, %v196
    %vm215 = vcmask 523264
    %v217 = vsel %vm215, %v154, 0
    %219 = vmatprep.subr.bf16.mxu0 %v200
    %220 = vmatpush1.bf16.msra.mxu0 %v199
    %221 = vmatprep.subr.bf16.mxu0 %v202
    %222 = vmatpush1.bf16.msra.mxu0 %v201
    %223 = vmatprep.subr.bf16.mxu0 %v204
    %224 = vmatpush1.bf16.msra.mxu0 %v203
    %225 = vmatprep.subr.bf16.mxu0 %v206
    %226 = vmatpush1.bf16.msra.mxu0 %v205
    %227 = vmatprep.subr.bf16.mxu0 0
    %228 = vmatpush1.bf16.msra.mxu0 0
    %229 = vmatprep.subr.bf16.mxu0 0
    %230 = vmatpush1.bf16.msra.mxu0 0
    %231 = vmatprep.subr.bf16.mxu0 0
    %232 = vmatpush1.bf16.msra.mxu0 0
    %233 = vmatprep.subr.bf16.mxu0 0
    %234 = vmatpush1.bf16.msra.mxu0 0
    %235 = vmatprep.subr.bf16.mxu0 0
    %236 = vmatpush1.bf16.msra.mxu0 0
    %237 = vmatprep.subr.bf16.mxu0 0
    %238 = vmatpush1.bf16.msra.mxu0 0
    %239 = vmatprep.subr.bf16.mxu0 0
    %240 = vmatpush1.bf16.msra.mxu0 0
    %241 = vmatprep.subr.bf16.mxu0 0
    %242 = vmatpush1.bf16.msra.mxu0 0
    %243 = vmatprep.subr.bf16.mxu0 0
    %244 = vmatpush1.bf16.msra.mxu0 0
    %245 = vmatprep.subr.bf16.mxu0 0
    %246 = vmatpush1.bf16.msra.mxu0 0
    %247 = vmatprep.subr.bf16.mxu0 0
    %248 = vmatpush1.bf16.msra.mxu0 0
    %249 = vmatprep.subr.bf16.mxu0 0
    %250 = vmatpush1.bf16.msra.mxu0 0
    %251 = vmatprep.mubr.bf16.mxu0 0
    %252 = vmatmul.mubr.bf16.gmra.mrb[0].mxu0 %v217
    %v253 = vpop.f32.mrb[0].mxu0
    %v254 = vadd.f32 %v168, %v253
    %v255 = vpop.f32.mrb[0].mxu0
    %v256 = vadd.f32 %v172, %v255
    %v257 = vpop.f32.mrb[0].mxu0
    %v258 = vpop.f32.mrb[0].mxu0
    %259 = vdwg.mxu0
    %v260 = vmul.f32 %v254, 0.5
    %v261 = vmul.f32 %v256, 0.5
    %v262 = vmul.f32 %v254, 0.044715
    %v263 = vmul.f32 %v256, 0.044715
    %v264 = vmul.f32 %v262, %v254
    %v265 = vmul.f32 %v263, %v256
    %v266 = vmul.f32 %v264, %v254
    %v267 = vmul.f32 %v265, %v256
    %v268 = vadd.f32 %v254, %v266
    %v269 = vadd.f32 %v256, %v267
    %v270 = vmul.f32 %v268, 0.7978846
    %v271 = vmul.f32 %v269, 0.7978846
    %v272 = vtanh.pop %v270
    %v273 = vtanh.pop %v271
    %v274 = vadd.f32 %v272, 1.0
    %v275 = vadd.f32 %v273, 1.0
    %v276 = vmul.f32 %v260, %v274
    %v277 = vmul.f32 %v261, %v275
    %v278 = vpack.c.bf16 %v276, %v276
    %v279 = vpack.c.bf16 %v277, %v277
    %v280 = vld [vmem:[%s5] sm:$0xff]
    %v281 = vld [vmem:[%s5 + $0x8] sm:$0xff]
    %v282 = vld [vmem:[%s5 + $0x10] sm:$0xff]
    %v283 = vld [vmem:[%s5 + $0x18] sm:$0xff]
    %v284 = vld [vmem:[%s5 + $0x20] sm:$0xff]
    %v285 = vld [vmem:[%s5 + $0x28] sm:$0xff]
    %v286 = vld [vmem:[%s5 + $0x30] sm:$0xff]
    %v287 = vld [vmem:[%s5 + $0x38] sm:$0xff]
    %v288 = vld [vmem:[%s5 + $0x40] sm:$0xff]
    %v289 = vld [vmem:[%s5 + $0x48] sm:$0xff]
    %v290 = vld [vmem:[%s5 + $0x50] sm:$0xff]
    %v291 = vld [vmem:[%s5 + $0x58] sm:$0xff]
    %v292 = vld [vmem:[%s5 + $0x60] sm:$0xff]
    %v293 = vld [vmem:[%s5 + $0x68] sm:$0xff]
    %v294 = vld [vmem:[%s5 + $0x70] sm:$0xff]
    %v295 = vld [vmem:[%s5 + $0x78] sm:$0xff]
    %v296 = vld [vmem:[%s5 + $0x80] sm:$0xff]
    %v297 = vld [vmem:[%s5 + $0x88] sm:$0xff]
    %v298 = vld [vmem:[%s5 + $0x90] sm:$0xff]
    %v299 = vld [vmem:[%s5 + $0x98] sm:$0xff]
    %v300 = vld [vmem:[%s5 + $0xa0] sm:$0xff]
    %v301 = vld [vmem:[%s5 + $0xa8] sm:$0xff]
    %v302 = vld [vmem:[%s5 + $0xb0] sm:$0xff]
    %v303 = vld [vmem:[%s5 + $0xb8] sm:$0xff]
    %v304 = vld [vmem:[%s5 + $0xc0] sm:$0xff]
    %v305 = vld [vmem:[%s5 + $0xc8] sm:$0xff]
    %v306 = vld [vmem:[%s5 + $0xd0] sm:$0xff]
    %v307 = vld [vmem:[%s5 + $0xd8] sm:$0xff]
    %v308 = vld [vmem:[%s5 + $0xe0] sm:$0xff]
    %v309 = vld [vmem:[%s5 + $0xe8] sm:$0xff]
    %v310 = vld [vmem:[%s5 + $0xf0] sm:$0xff]
    %v311 = vld [vmem:[%s5 + $0xf8] sm:$0xff]
    %v312 = vld [vmem:[%s6] sm:$0x3]
    %v314 = vlaneseq
    %v315 = vshrl.u32 %v314, 7
    %v316 = vsub.s32 0, %v315
    %v317 = vrot.slane %v312, %v316
    %v318 = vlaneseq
    %v319 = vshrl.u32 %v318, 7
    %v320 = vsub.s32 1, %v319
    %v321 = vrot.slane %v312, %v320
    %v356 = vunpack.c.l.b16 %v280
    %v357 = vunpack.c.h.b16 %v280
    %v358 = vunpack.c.l.b16 %v281
    %v359 = vunpack.c.h.b16 %v281
    %v360 = vunpack.c.l.b16 %v282
    %v361 = vunpack.c.h.b16 %v282
    %v362 = vunpack.c.l.b16 %v283
    %v363 = vunpack.c.h.b16 %v283
    %v364 = vunpack.c.l.b16 %v284
    %v365 = vunpack.c.h.b16 %v284
    %v366 = vunpack.c.l.b16 %v285
    %v367 = vunpack.c.h.b16 %v285
    %v368 = vunpack.c.l.b16 %v286
    %v369 = vunpack.c.h.b16 %v286
    %v370 = vunpack.c.l.b16 %v287
    %v371 = vunpack.c.h.b16 %v287
    %v372 = vunpack.c.l.b16 %v288
    %v373 = vunpack.c.h.b16 %v288
    %v374 = vunpack.c.l.b16 %v289
    %v375 = vunpack.c.h.b16 %v289
    %v376 = vunpack.c.l.b16 %v290
    %v377 = vunpack.c.h.b16 %v290
    %v378 = vunpack.c.l.b16 %v291
    %v379 = vunpack.c.h.b16 %v291
    %v380 = vunpack.c.l.b16 %v292
    %v381 = vunpack.c.h.b16 %v292
    %v382 = vunpack.c.l.b16 %v293
    %v383 = vunpack.c.h.b16 %v293
    %v384 = vunpack.c.l.b16 %v294
    %v385 = vunpack.c.h.b16 %v294
    %v386 = vunpack.c.l.b16 %v295
    %v387 = vunpack.c.h.b16 %v295
    %v388 = vunpack.c.l.b16 %v296
    %v389 = vunpack.c.h.b16 %v296
    %v390 = vunpack.c.l.b16 %v297
    %v391 = vunpack.c.h.b16 %v297
    %v392 = vunpack.c.l.b16 %v298
    %v393 = vunpack.c.h.b16 %v298
    %v394 = vunpack.c.l.b16 %v299
    %v395 = vunpack.c.h.b16 %v299
    %v396 = vunpack.c.l.b16 %v300
    %v397 = vunpack.c.h.b16 %v300
    %v398 = vunpack.c.l.b16 %v301
    %v399 = vunpack.c.h.b16 %v301
    %v400 = vunpack.c.l.b16 %v302
    %v401 = vunpack.c.h.b16 %v302
    %v402 = vunpack.c.l.b16 %v303
    %v403 = vunpack.c.h.b16 %v303
    %v404 = vunpack.c.l.b16 %v304
    %v405 = vunpack.c.h.b16 %v304
    %v406 = vunpack.c.l.b16 %v305
    %v407 = vunpack.c.h.b16 %v305
    %v408 = vunpack.c.l.b16 %v306
    %v409 = vunpack.c.h.b16 %v306
    %v410 = vunpack.c.l.b16 %v307
    %v411 = vunpack.c.h.b16 %v307
    %v412 = vunpack.c.l.b16 %v308
    %v413 = vunpack.c.h.b16 %v308
    %v414 = vunpack.c.l.b16 %v309
    %v415 = vunpack.c.h.b16 %v309
    %v416 = vunpack.c.l.b16 %v310
    %v417 = vunpack.c.h.b16 %v310
    %v418 = vunpack.c.l.b16 %v311
    %v419 = vunpack.c.h.b16 %v311
    %v420 = vpack.c.b16 %v358, %v356
    %v421 = vpack.c.b16 %v359, %v357
    %v422 = vpack.c.b16 %v362, %v360
    %v423 = vpack.c.b16 %v363, %v361
    %v424 = vpack.c.b16 %v366, %v364
    %v425 = vpack.c.b16 %v367, %v365
    %v426 = vpack.c.b16 %v370, %v368
    %v427 = vpack.c.b16 %v371, %v369
    %v428 = vpack.c.b16 %v374, %v372
    %v429 = vpack.c.b16 %v375, %v373
    %v430 = vpack.c.b16 %v378, %v376
    %v431 = vpack.c.b16 %v379, %v377
    %v432 = vpack.c.b16 %v382, %v380
    %v433 = vpack.c.b16 %v383, %v381
    %v434 = vpack.c.b16 %v386, %v384
    %v435 = vpack.c.b16 %v387, %v385
    %v436 = vpack.c.b16 %v390, %v388
    %v437 = vpack.c.b16 %v391, %v389
    %v438 = vpack.c.b16 %v394, %v392
    %v439 = vpack.c.b16 %v395, %v393
    %v440 = vpack.c.b16 %v398, %v396
    %v441 = vpack.c.b16 %v399, %v397
    %v442 = vpack.c.b16 %v402, %v400
    %v443 = vpack.c.b16 %v403, %v401
    %v444 = vpack.c.b16 %v406, %v404
    %v445 = vpack.c.b16 %v407, %v405
    %v446 = vpack.c.b16 %v410, %v408
    %v447 = vpack.c.b16 %v411, %v409
    %v448 = vpack.c.b16 %v414, %v412
    %v449 = vpack.c.b16 %v415, %v413
    %v450 = vpack.c.b16 %v418, %v416
    %v451 = vpack.c.b16 %v419, %v417
    %484 = vmatprep.subr.bf16.mxu0 %v421
    %485 = vmatpush1.bf16.msra.mxu0 %v420
    %486 = vmatprep.subr.bf16.mxu0 %v423
    %487 = vmatpush1.bf16.msra.mxu0 %v422
    %488 = vmatprep.subr.bf16.mxu0 %v425
    %489 = vmatpush1.bf16.msra.mxu0 %v424
    %490 = vmatprep.subr.bf16.mxu0 %v427
    %491 = vmatpush1.bf16.msra.mxu0 %v426
    %492 = vmatprep.subr.bf16.mxu0 %v429
    %493 = vmatpush1.bf16.msra.mxu0 %v428
    %494 = vmatprep.subr.bf16.mxu0 %v431
    %495 = vmatpush1.bf16.msra.mxu0 %v430
    %496 = vmatprep.subr.bf16.mxu0 %v433
    %497 = vmatpush1.bf16.msra.mxu0 %v432
    %498 = vmatprep.subr.bf16.mxu0 %v435
    %499 = vmatpush1.bf16.msra.mxu0 %v434
    %500 = vmatprep.subr.bf16.mxu0 %v437
    %501 = vmatpush1.bf16.msra.mxu0 %v436
    %502 = vmatprep.subr.bf16.mxu0 %v439
    %503 = vmatpush1.bf16.msra.mxu0 %v438
    %504 = vmatprep.subr.bf16.mxu0 %v441
    %505 = vmatpush1.bf16.msra.mxu0 %v440
    %506 = vmatprep.subr.bf16.mxu0 %v443
    %507 = vmatpush1.bf16.msra.mxu0 %v442
    %508 = vmatprep.subr.bf16.mxu0 %v445
    %509 = vmatpush1.bf16.msra.mxu0 %v444
    %510 = vmatprep.subr.bf16.mxu0 %v447
    %511 = vmatpush1.bf16.msra.mxu0 %v446
    %512 = vmatprep.subr.bf16.mxu0 %v449
    %513 = vmatpush1.bf16.msra.mxu0 %v448
    %514 = vmatprep.subr.bf16.mxu0 %v451
    %515 = vmatpush1.bf16.msra.mxu0 %v450
    %516 = vmatprep.mubr.bf16.mxu0 %v279
    %517 = vmatmul.mubr.bf16.gmra.mrb[0].mxu0 %v278
    %v518 = vpop.f32.mrb[0].mxu0
    %v519 = vadd.f32 %v317, %v518
    %v520 = vpop.f32.mrb[0].mxu0
    %v521 = vadd.f32 %v321, %v520
    %v522 = vpop.f32.mrb[0].mxu0
    %v523 = vpop.f32.mrb[0].mxu0
    %524 = vdwg.mxu0
    %525 = vst [vmem:[#allocation2] sm:$0xff] %v519
    %526 = vst [vmem:[#allocation2 + $0x8] sm:$0xff] %v521
    // Predicated region
    $region30: #{time_mlp_pallas.1} parent=1 // pred_check
      _
    $region31: #{time_mlp_pallas.1} parent=1 // pred_check_branch
      %528 = sbr.rel (0) target = $region33
    $region32: #{time_mlp_pallas.1} parent=1 // pred_region
      %s530 = ssub.s32 256, 256
      %531 = vsyncadd [#allocation3], %s530
      %s533 = sshll.u32 [#allocation2], 4
      %s534 = int_to_ptr.vmem [resolvable:$true] %s533
      %536 = dma.vmem_to_hbm [thread:$0]  %s534, 256, %s7, [#allocation3]
    $region33: #{time_mlp_pallas.1} parent=1 // pred_fallthru
      _
    // Predicated region
    $region34: #{time_mlp_pallas.1} parent=1 // pred_check
      _
    $region35: #{time_mlp_pallas.1} parent=1 // pred_check_branch
      %538 = sbr.rel (0) target = $region37
    $region36: #{time_mlp_pallas.1} parent=1 // pred_region
      %539 = dma.done [#allocation3], 256
    $region37: #{time_mlp_pallas.1} parent=1 // pred_fallthru
      _
    %540 = vsyncpa [#allocation3], 1

</llo_original>
